<compile_context>
chip_gen: v7x
topology: tpu7x:2x2x1
jax: 0.10.0
libtpu: 0.0.40
codegen_flags: <defaults>
</compile_context>

<pallas_src>
import functools

import jax
import jax.numpy as jnp
from jax.experimental import pallas as pl
from jax.experimental.pallas import tpu as pltpu

LN_EPS = 1e-5
NEG_INF = -1e9


def _layernorm(x, g, b):
    # Single-pass statistics: mean and mean-of-squares are independent
    # reductions (var = E[x^2] - mu^2) instead of two sequential XLU passes.
    mu = jnp.mean(x, axis=-1, keepdims=True)
    ms = jnp.mean(x * x, axis=-1, keepdims=True)
    var = ms - mu * mu
    return (x - mu) * jax.lax.rsqrt(var + LN_EPS) * g + b


# ---------------------------------------------------------------------------
# Kernels
# ---------------------------------------------------------------------------
def embed_ln_kernel(we_ref, pe_ref, g_ref, b_ref, o_ref):
    x = we_ref[...] + pe_ref[...][None, :, :]
    o_ref[...] = _layernorm(x, g_ref[...][None, :, :], b_ref[...][None, :, :])


def fused_encoder_kernel(x0_ref, bias_ref,
                         wqkv_ref, bqkv_ref, wo_ref, bo_ref,
                         ln1g_ref, ln1b_ref,
                         wi_ref, bi_ref, wo2_ref, bo2_ref,
                         ln2g_ref, ln2b_ref,
                         o_ref, h_sc, ctx_sc, *, num_heads):
    """One grid step == one encoder layer; hidden state resident in h_sc."""
    layer = pl.program_id(0)
    last = pl.num_programs(0) - 1
    B, S = bias_ref.shape
    T, H = x0_ref.shape               # T = B * S
    Dh = H // num_heads

    # Seed the resident hidden state from the (already LayerNorm'ed) embedding.
    @pl.when(layer == 0)
    def _():
        h_sc[...] = x0_ref[...]

    h2 = h_sc[...]                    # [T, H] f32 resident state
    hb = h2.astype(jnp.bfloat16)      # bf16 operand for the MXU

    # Fused QKV: one [T,H] x [H,3H] matmul, slices at H-sized lane offsets.
    qkv = (jnp.dot(hb, wqkv_ref[0], preferred_element_type=jnp.float32)
           + bqkv_ref[0])
    scale = 1.0 / (Dh ** 0.5)         # folded into q once, not per score tile
    q3 = (qkv[:, :H] * scale).astype(jnp.bfloat16).reshape(B, S, H)
    k3 = qkv[:, H:2 * H].astype(jnp.bfloat16).reshape(B, S, H)
    v3 = qkv[:, 2 * H:].astype(jnp.bfloat16).reshape(B, S, H)

    # Loop-invariant key-padding bias, hoisted out of the head loop.
    key_bias = bias_ref[...][:, None, :]          # [B, 1, S]

    # TODO(synk): batching all heads into one contraction needs a multi-batch
    # dot_general / 4-D minor transpose Mosaic does not guarantee; keep a
    # static head loop, but write each head's context into a bf16 VMEM scratch
    # at its lane offset so the output projection is ONE full-K matmul.
    for hd in range(num_heads):
        sl = slice(hd * Dh, (hd + 1) * Dh)
        s = jnp.einsum('bqd,bkd->bqk', q3[:, :, sl], k3[:, :, sl],
                       preferred_element_type=jnp.float32)
        s = s + key_bias
        s = s - jnp.max(s, axis=-1, keepdims=True)
        p = jnp.exp(s)
        p = p * pl.reciprocal(jnp.sum(p, axis=-1, keepdims=True), approx=True)
        ctx = jnp.einsum('bqk,bkd->bqd', p.astype(jnp.bfloat16), v3[:, :, sl],
                         preferred_element_type=jnp.float32)
        ctx_sc[:, sl] = ctx.reshape(T, Dh).astype(jnp.bfloat16)

    # Single output projection [T,H] x [H,H] (full contraction depth).
    attn = (jnp.dot(ctx_sc[...], wo_ref[0], preferred_element_type=jnp.float32)
            + bo_ref[0])

    h1 = _layernorm(h2 + attn, ln1g_ref[0], ln1b_ref[0])

    ff = (jnp.dot(h1.astype(jnp.bfloat16), wi_ref[0],
                  preferred_element_type=jnp.float32) + bi_ref[0])
    ff = jax.nn.gelu(ff)  # TODO(synk): reference uses erf-GELU; tanh approx here.
    ff = (jnp.dot(ff.astype(jnp.bfloat16), wo2_ref[0],
                  preferred_element_type=jnp.float32) + bo2_ref[0])

    out = _layernorm(h1 + ff, ln2g_ref[0], ln2b_ref[0])

    # Carry store on all but the last step; HBM-bound output store only once.
    @pl.when(layer < last)
    def _():
        h_sc[...] = out

    @pl.when(layer == last)
    def _():
        o_ref[...] = out


# ---------------------------------------------------------------------------
# Wrappers
# ---------------------------------------------------------------------------
def _const_spec(shape):
    zeros = (0,) * len(shape)
    return pl.BlockSpec(tuple(shape), lambda l, z=zeros: z)


def _layer_spec(tail_shape, pipeline_mode=None):
    zeros = (0,) * len(tail_shape)
    idx = lambda l, z=zeros: (l,) + z
    if pipeline_mode is None:
        return pl.BlockSpec((1,) + tuple(tail_shape), idx)
    return pl.BlockSpec((1,) + tuple(tail_shape), idx, pipeline_mode=pipeline_mode)


def _nbytes(a):
    return a.size * a.dtype.itemsize


def _vmem_capacity_bytes():
    try:
        return int(pltpu.get_tpu_info().vmem_capacity_bytes)
    except Exception:
        return 64 * 2 ** 20        # conservative (v7x per-core VMEM)


def embed_layernorm(we, pe, g, b):
    return pl.pallas_call(
        embed_ln_kernel,
        out_shape=jax.ShapeDtypeStruct(we.shape, jnp.float32),
        in_specs=[pl.BlockSpec(memory_space=pltpu.MemorySpace.VMEM)] * 4,
        out_specs=pl.BlockSpec(memory_space=pltpu.MemorySpace.VMEM),
        compiler_params=pltpu.CompilerParams(vmem_limit_bytes=32 * 2 ** 20),
    )(we, pe, g, b)


def fused_text_encoder(x0, attn_bias, stacked, num_heads):
    (wqkv, bqkv, wo, bo, ln1g, ln1b, wi, bi, wo2, bo2, ln2g, ln2b) = stacked
    B, S = attn_bias.shape
    T, H = x0.shape
    L = wqkv.shape[0]
    I = wi.shape[-1]

    cap = _vmem_capacity_bytes()
    # Deeper pipelining of the big FFN weight streams only with plentiful VMEM
    # (v5e/v6e-class, 128 MiB) and a deep enough layer grid; never on v7x.
    deep_ffn = cap >= 96 * 2 ** 20 and L >= 3
    ffn_mode = pl.Buffered(3) if deep_ffn else None
    # TODO(synk): at realistic H=1024/I=4096 on v7x, tile the FFN contraction
    # over a second grid axis so wi/wo2 are not double-buffered whole.

    args = (x0, attn_bias, wqkv, bqkv, wo, bo, ln1g, ln1b,
            wi, bi, wo2, bo2, ln2g, ln2b)

    in_specs = [
        _const_spec(x0.shape), _const_spec(attn_bias.shape),
        _layer_spec((H, 3 * H)), _layer_spec((1, 3 * H)),     # fused QKV
        _layer_spec((H, H)), _layer_spec((1, H)),             # Wo, bo
        _layer_spec((1, H)), _layer_spec((1, H)),             # LN1 gamma/beta
        _layer_spec((H, I), ffn_mode), _layer_spec((1, I)),   # FFN in
        _layer_spec((I, H), ffn_mode), _layer_spec((1, H)),   # FFN out
        _layer_spec((1, H)), _layer_spec((1, H)),             # LN2 gamma/beta
    ]

    # Generation-aware VMEM budget: buffered per-layer weight slices + resident
    # IO + scratch + an allowance for in-kernel temporaries, capped below the
    # physical capacity of the current TPU generation.
    layer_bytes = sum(_nbytes(a) // a.shape[0] for a in args[2:])
    ffn_bytes = sum(_nbytes(a) // a.shape[0] for a in (wi, bi, wo2))
    wbuf = 2 * layer_bytes + (ffn_bytes if deep_ffn else 0)
    io_bytes = 2 * (_nbytes(x0) + _nbytes(attn_bias)) + 2 * T * H * 4
    scratch_bytes = T * H * 4 + T * H * 2
    temp_bytes = 12 * T * H * 4 + 2 * B * S * S * 4
    needed = wbuf + io_bytes + scratch_bytes + temp_bytes
    vmem_limit = int(min(max(needed, 32 * 2 ** 20), cap - 8 * 2 ** 20))

    return pl.pallas_call(
        functools.partial(fused_encoder_kernel, num_heads=num_heads),
        out_shape=jax.ShapeDtypeStruct((T, H), jnp.float32),
        grid_spec=pltpu.PrefetchScalarGridSpec(
            num_scalar_prefetch=0,
            grid=(L,),
            in_specs=in_specs,
            out_specs=pl.BlockSpec((T, H), lambda l: (0, 0)),
            scratch_shapes=[pltpu.VMEM((T, H), jnp.float32),   # resident state
                            pltpu.VMEM((T, H), jnp.bfloat16)], # head contexts
        ),
        compiler_params=pltpu.CompilerParams(
            dimension_semantics=("arbitrary",),
            vmem_limit_bytes=vmem_limit,
        ),
    )(*args)


# ---------------------------------------------------------------------------
# Model
# ---------------------------------------------------------------------------
class DCNCLIP30M1024:
    """Synthetic-weight Pallas port of the AltCLIP text encoder forward."""

    def __init__(self, vocab_size=100, hidden=32, num_heads=4, intermediate=64,
                 num_layers=3, max_length=8, seed=0):
        assert hidden % num_heads == 0
        self.vocab_size = vocab_size
        self.hidden = hidden
        self.num_heads = num_heads
        self.intermediate = intermediate
        self.num_layers = num_layers
        self.max_length = max_length
        H, I, L = hidden, intermediate, num_layers

        keys = iter(jax.random.split(jax.random.PRNGKey(seed), 3 + L * 6))

        def nrm(shape, scale=0.02):
            return (scale * jax.random.normal(next(keys), shape)).astype(jnp.float32)

        # Embedding tables (f32; feed LayerNorm directly).
        self.word_emb = nrm((vocab_size, H))
        self.pos_emb = nrm((max_length, H))
        self.type_emb = nrm((1, H))
        self.emb_ln_g = jnp.ones((1, H), jnp.float32)
        self.emb_ln_b = jnp.zeros((1, H), jnp.float32)

        # Per-layer weights stacked along a leading layer axis.  Matmul weights
        # stored bf16 (MXU path); biases / LayerNorm params f32.  Q/K/V fused
        # into one [H, 3H] weight so the kernel runs a single QKV matmul.
        wqkv, wo, wi, wo2 = [], [], [], []
        for _ in range(L):
            wq_l, wk_l, wv_l = nrm((H, H)), nrm((H, H)), nrm((H, H))
            wqkv.append(jnp.concatenate([wq_l, wk_l, wv_l], axis=1))
            wo.append(nrm((H, H)))
            wi.append(nrm((H, I)))
            wo2.append(nrm((I, H)))
        self.wqkv = jnp.stack(wqkv).astype(jnp.bfloat16)
        self.wo = jnp.stack(wo).astype(jnp.bfloat16)
        self.wi = jnp.stack(wi).astype(jnp.bfloat16)
        self.wo2 = jnp.stack(wo2).astype(jnp.bfloat16)

        zeros_h = jnp.zeros((L, 1, H), jnp.float32)
        ones_h = jnp.ones((L, 1, H), jnp.float32)
        self.bqkv = jnp.zeros((L, 1, 3 * H), jnp.float32)
        self.bo = zeros_h
        self.ln1g = ones_h
        self.ln1b = zeros_h
        self.bi = jnp.zeros((L, 1, I), jnp.float32)
        self.bo2 = zeros_h
        self.ln2g = ones_h
        self.ln2b = zeros_h

    def forward(self, input_ids, attention_mask):
        # TODO(synk): the AltCLIPProcessor tokenizer (text -> ids) has no Pallas
        # equivalent; this forward takes pre-tokenized, max_length-padded ids.
        # TODO(synk): XLM-Roberta derives position ids from the attention mask
        # with a padding_idx offset; synthetic weights use positions 0..S-1.
        B, S = input_ids.shape
        assert S == self.max_length
        H = self.hidden

        # Pad the sequence axis to a sublane multiple so score tiles and the
        # [B*S,H]<->[B,S,H] reshapes stay layout-friendly; padded keys are
        # masked out via the additive attention bias, padded queries sliced off.
        S_pad = -(-S // 8) * 8
        pad = S_pad - S

        we = jnp.take(self.word_emb, input_ids, axis=0)            # [B, S, H]
        pe = self.pos_emb[:S] + self.type_emb                      # [S, H]
        mask = attention_mask.astype(jnp.float32)                  # [B, S]
        if pad:
            we = jnp.pad(we, ((0, 0), (0, pad), (0, 0)))
            pe = jnp.pad(pe, ((0, pad), (0, 0)))
            mask = jnp.pad(mask, ((0, 0), (0, pad)))
        attn_bias = (1.0 - mask) * NEG_INF                         # [B, S_pad]

        # Embedding sum + LayerNorm (small separate kernel), hoisted out of the
        # fused encoder so the latter carries a single resident activation.
        x0 = embed_layernorm(we, pe, self.emb_ln_g, self.emb_ln_b)  # [B,S_pad,H]

        # 'penultimate_hidden_state' = output of all-but-the-last encoder
        # layer, so the final layer is never computed at all.
        n_active = self.num_layers - 1
        if n_active == 0:
            return x0[:, :S, :]

        stacked = tuple(a[:n_active] for a in (
            self.wqkv, self.bqkv, self.wo, self.bo, self.ln1g, self.ln1b,
            self.wi, self.bi, self.wo2, self.bo2, self.ln2g, self.ln2b))
        out = fused_text_encoder(x0.reshape(B * S_pad, H), attn_bias,
                                 stacked, self.num_heads)
        return out.reshape(B, S_pad, H)[:, :S, :]

    __call__ = forward

    def encode(self, input_ids, attention_mask):
        z = self(input_ids, attention_mask)
        if z.ndim == 2:
            z = z[:, None, :]
        return z


if __name__ == "__main__":
    B, S = 2, 8
    model = DCNCLIP30M1024(max_length=S)

    key = jax.random.PRNGKey(0)
    input_ids = jax.random.randint(key, (B, S), 1, model.vocab_size,
                                   dtype=jnp.int32)
    # Emulate padding='max_length': last two positions of sample 1 are pads.
    input_ids = input_ids.at[1, -2:].set(0)
    attention_mask = jnp.ones((B, S), jnp.int32).at[1, -2:].set(0)

    z = model.encode(input_ids, attention_mask)
    z = jax.block_until_ready(z)
    assert z.shape == (B, S, model.hidden), z.shape
    assert z.dtype == jnp.float32
    assert bool(jnp.all(jnp.isfinite(z)))
    print("KERNEL_OK")
</pallas_src>

<mosaic_0001>
module attributes {stable_mosaic.version = 11 : i64} {
  func.func @embed_ln_kernel(%arg0: memref<2x8x32xf32, #tpu.memory_space<vmem>>, %arg1: memref<8x32xf32, #tpu.memory_space<vmem>>, %arg2: memref<1x32xf32, #tpu.memory_space<vmem>>, %arg3: memref<1x32xf32, #tpu.memory_space<vmem>>, %arg4: memref<2x8x32xf32, #tpu.memory_space<vmem>>) attributes {dimension_semantics = [], scalar_prefetch = 0 : i64, scratch_operands = 0 : i64, tpu.core_type = #tpu.core_type<tc>} {
    %c0 = arith.constant 0 : index
    %c0_0 = arith.constant 0 : index
    %c0_1 = arith.constant 0 : index
    %0 = vector.load %arg0[%c0, %c0_0, %c0_1] : memref<2x8x32xf32, #tpu.memory_space<vmem>>, vector<2x8x32xf32>
    %c0_2 = arith.constant 0 : index
    %c0_3 = arith.constant 0 : index
    %1 = vector.load %arg1[%c0_2, %c0_3] : memref<8x32xf32, #tpu.memory_space<vmem>>, vector<8x32xf32>
    %2 = vector.shape_cast %1 : vector<8x32xf32> to vector<1x8x32xf32>
    %3 = vector.broadcast %2 : vector<1x8x32xf32> to vector<2x8x32xf32>
    %4 = arith.addf %0, %3 : vector<2x8x32xf32>
    %c0_4 = arith.constant 0 : index
    %c0_5 = arith.constant 0 : index
    %5 = vector.load %arg2[%c0_4, %c0_5] : memref<1x32xf32, #tpu.memory_space<vmem>>, vector<1x32xf32>
    %6 = vector.shape_cast %5 : vector<1x32xf32> to vector<1x1x32xf32>
    %c0_6 = arith.constant 0 : index
    %c0_7 = arith.constant 0 : index
    %7 = vector.load %arg3[%c0_6, %c0_7] : memref<1x32xf32, #tpu.memory_space<vmem>>, vector<1x32xf32>
    %8 = vector.shape_cast %7 : vector<1x32xf32> to vector<1x1x32xf32>
    %cst = arith.constant dense<0.000000e+00> : vector<2x8xf32>
    %9 = vector.multi_reduction <add>, %4, %cst [2] : vector<2x8x32xf32> to vector<2x8xf32>
    %10 = vector.shape_cast %9 : vector<2x8xf32> to vector<2x8x1xf32>
    %cst_8 = arith.constant 3.200000e+01 : f32
    %11 = vector.broadcast %cst_8 : f32 to vector<2x8x1xf32>
    %12 = arith.divf %10, %11 : vector<2x8x1xf32>
    %13 = arith.mulf %4, %4 : vector<2x8x32xf32>
    %cst_9 = arith.constant dense<0.000000e+00> : vector<2x8xf32>
    %14 = vector.multi_reduction <add>, %13, %cst_9 [2] : vector<2x8x32xf32> to vector<2x8xf32>
    %15 = vector.shape_cast %14 : vector<2x8xf32> to vector<2x8x1xf32>
    %cst_10 = arith.constant 3.200000e+01 : f32
    %16 = vector.broadcast %cst_10 : f32 to vector<2x8x1xf32>
    %17 = arith.divf %15, %16 : vector<2x8x1xf32>
    %18 = arith.mulf %12, %12 : vector<2x8x1xf32>
    %19 = arith.subf %17, %18 : vector<2x8x1xf32>
    %20 = vector.broadcast %12 : vector<2x8x1xf32> to vector<2x8x32xf32>
    %21 = arith.subf %4, %20 : vector<2x8x32xf32>
    %cst_11 = arith.constant 9.99999974E-6 : f32
    %22 = vector.broadcast %cst_11 : f32 to vector<2x8x1xf32>
    %23 = arith.addf %19, %22 : vector<2x8x1xf32>
    %24 = math.rsqrt %23 : vector<2x8x1xf32>
    %25 = vector.broadcast %24 : vector<2x8x1xf32> to vector<2x8x32xf32>
    %26 = arith.mulf %21, %25 : vector<2x8x32xf32>
    %27 = vector.broadcast %6 : vector<1x1x32xf32> to vector<2x8x32xf32>
    %28 = arith.mulf %26, %27 : vector<2x8x32xf32>
    %29 = vector.broadcast %8 : vector<1x1x32xf32> to vector<2x8x32xf32>
    %30 = arith.addf %28, %29 : vector<2x8x32xf32>
    %c0_12 = arith.constant 0 : index
    %c0_13 = arith.constant 0 : index
    %c0_14 = arith.constant 0 : index
    %31 = vector.load %arg4[%c0_12, %c0_13, %c0_14] : memref<2x8x32xf32, #tpu.memory_space<vmem>>, vector<2x8x32xf32>
    tpu.vector_store %arg4[%c0_12, %c0_13, %c0_14], %30 {strides = array<i32>} : memref<2x8x32xf32, #tpu.memory_space<vmem>>, vector<2x8x32xf32>,
    return
  }
}

</mosaic_0001>

<llo_original>
// kernel: tpu_custom_call.1
$region0: #{tpu_custom_call.1}
  #allocation0 [shape = 'u32[]', space=smem, size = 0x4, offset = 0x4, fixed_abs, tag = 'smem constant byte address 0x4 - core index']
  #allocation1 [shape = 'u32[144,128]{1,0:T(1,128)}', space=vmem, size = 0x12000, scoped, tag = 'internal scratch']
  %s0 = inlined_call_operand.hbm [shape: f32[2,8,32], index: 0, kind: input, shape index: {}]
  %s1 = inlined_call_operand.hbm [shape: f32[8,32], index: 1, kind: input, shape index: {}]
  %s2 = inlined_call_operand.vmem [shape: f32[1,32], index: 2, kind: input, shape index: {}]
  %s3 = inlined_call_operand.vmem [shape: f32[1,32], index: 3, kind: input, shape index: {}]
  %s4 = inlined_call_operand.hbm [shape: f32[2,8,32], index: 4, kind: output, shape index: {}]
  %s5 = sld [smem:[#allocation0]]
  $region34: #{tpu_custom_call.1} parent=0
    _
  %s7 = ssub.s32 1, %s5
  %s8 = scalar_select 0, %s7, %s5
  $region1: #{tpu_custom_call.1} parent=0
    #allocation2 [shape = 'u8[8192]{0}', space=vmem, size = 0x2000, scoped, tag = 'input window, operand 0, single buffered']
    #allocation3 [shape = 's32[1]{0}', space=sflag, size = 0x4, scoped, tag = 'scoped memory for tpu_custom_call.1']
    #allocation4 [shape = 's32[1]{0}', space=sflag, size = 0x4, scoped, tag = 'scoped memory for tpu_custom_call.1']
    #allocation5 [shape = 'u8[4096]{0}', space=vmem, size = 0x1000, scoped, tag = 'input window, operand 1, single buffered']
    #allocation6 [shape = 's32[1]{0}', space=sflag, size = 0x4, scoped, tag = 'scoped memory for tpu_custom_call.1']
    #allocation7 [shape = 'u8[8192]{0}', space=vmem, size = 0x2000, scoped, tag = 'output window, operand 0, single buffered']
    %9 = vsyncpa [#allocation3], 0
    %10 = vsyncpa [#allocation6], 0
    %11 = vsyncpa [#allocation4], 0
    // Predicated region
    $region2: #{tpu_custom_call.1} parent=1 // pred_check
      _
    $region3: #{tpu_custom_call.1} parent=1 // pred_check_branch
      %13 = sbr.rel (0) target = $region5
    $region4: #{tpu_custom_call.1} parent=1 // pred_region
      %s15 = ssub.s32 256, 256
      %16 = vsyncadd [#allocation3], %s15
      %s17 = sshll.u32 [#allocation2], 4
      %s18 = int_to_ptr.vmem [resolvable:$true] %s17
      %23 = dma.hbm_to_vmem [thread:$0]  %s0, 256, %s18, [#allocation3], 128, 128, 8
    $region5: #{tpu_custom_call.1} parent=1 // pred_fallthru
      _
    // Predicated region
    $region6: #{tpu_custom_call.1} parent=1 // pred_check
      _
    $region7: #{tpu_custom_call.1} parent=1 // pred_check_branch
      %25 = sbr.rel (0) target = $region9
    $region8: #{tpu_custom_call.1} parent=1 // pred_region
      %s27 = ssub.s32 128, 128
      %28 = vsyncadd [#allocation6], %s27
      %s30 = sshll.u32 [#allocation5], 4
      %s31 = int_to_ptr.vmem [resolvable:$true] %s30
      %33 = dma.hbm_to_vmem [thread:$0]  %s1, 128, %s31, [#allocation6]
    $region9: #{tpu_custom_call.1} parent=1 // pred_fallthru
      _
    // Predicated region
    $region10: #{tpu_custom_call.1} parent=1 // pred_check
      _
    $region11: #{tpu_custom_call.1} parent=1 // pred_check_branch
      %35 = sbr.rel (0) target = $region13
    $region12: #{tpu_custom_call.1} parent=1 // pred_region
      _
    $region13: #{tpu_custom_call.1} parent=1 // pred_fallthru
      _
    // Predicated region
    $region14: #{tpu_custom_call.1} parent=1 // pred_check
      _
    $region15: #{tpu_custom_call.1} parent=1 // pred_check_branch
      %37 = sbr.rel (0) target = $region17
    $region16: #{tpu_custom_call.1} parent=1 // pred_region
      _
    $region17: #{tpu_custom_call.1} parent=1 // pred_fallthru
      _
    // Predicated region
    $region18: #{tpu_custom_call.1} parent=1 // pred_check
      _
    $region19: #{tpu_custom_call.1} parent=1 // pred_check_branch
      %39 = sbr.rel (0) target = $region21
    $region20: #{tpu_custom_call.1} parent=1 // pred_region
      %40 = dma.done [#allocation3], 256
    $region21: #{tpu_custom_call.1} parent=1 // pred_fallthru
      _
    // Predicated region
    $region22: #{tpu_custom_call.1} parent=1 // pred_check
      _
    $region23: #{tpu_custom_call.1} parent=1 // pred_check_branch
      %42 = sbr.rel (0) target = $region25
    $region24: #{tpu_custom_call.1} parent=1 // pred_region
      %43 = dma.done [#allocation6], 128
    $region25: #{tpu_custom_call.1} parent=1 // pred_fallthru
      _
    %v44 = vld [vmem:[#allocation2] sm:$0xff]
    %v45 = vld [vmem:[#allocation2 + $0x8] sm:$0xff]
    %v46 = vld [vmem:[#allocation5] sm:$0xff]
    %v47 = vadd.f32 %v44, %v46
    %v48 = vadd.f32 %v45, %v46
    %v49 = vld [vmem:[%s2] sm:$0x1]
    %v50 = vld [vmem:[%s3] sm:$0x1]
    %vm51 = vcmask 261120
    %v52 = vsel %vm51, %v47, 0.0
    %53 = vadd.xlane.f32.xlu0 %v52
    %v54 = vpop.xlane.xlu0 %53
    %v55 = vsel %vm51, %v48, 0.0
    %56 = vadd.xlane.f32.xlu0 %v55
    %v57 = vpop.xlane.xlu0 %56
    %v58 = vrcp.pop 32.0
    %v59 = vmul.f32 %v54, %v58
    %v60 = vmul.f32 %v57, %v58
    %v61 = vmul.f32 %v47, %v47
    %v62 = vmul.f32 %v48, %v48
    %v63 = vsel %vm51, %v61, 0.0
    %64 = vadd.xlane.f32.xlu0 %v63
    %v65 = vpop.xlane.xlu0 %64
    %v66 = vsel %vm51, %v62, 0.0
    %67 = vadd.xlane.f32.xlu0 %v66
    %v68 = vpop.xlane.xlu0 %67
    %v69 = vmul.f32 %v65, %v58
    %v70 = vmul.f32 %v68, %v58
    %v71 = vmul.f32 %v59, %v59
    %v72 = vmul.f32 %v60, %v60
    %v73 = vsub.f32 %v69, %v71
    %v74 = vsub.f32 %v70, %v72
    %v75 = vsub.f32 %v47, %v59
    %v76 = vsub.f32 %v48, %v60
    %v77 = vadd.f32 %v73, 1e-05
    %v78 = vadd.f32 %v74, 1e-05
    %v79 = vrsqrt.pop %v77
    %v80 = vrsqrt.pop %v78
    %v81 = vmul.f32 %v75, %v79
    %v82 = vmul.f32 %v76, %v80
    %v84 = vlaneseq
    %v85 = vshrl.u32 %v84, 7
    %v86 = vsub.s32 0, %v85
    %v87 = vrot.slane %v49, %v86
    %v89 = vmul.f32 %v81, %v87
    %v90 = vmul.f32 %v82, %v87
    %v92 = vlaneseq
    %v93 = vshrl.u32 %v92, 7
    %v94 = vsub.s32 0, %v93
    %v95 = vrot.slane %v50, %v94
    %v97 = vadd.f32 %v89, %v95
    %v98 = vadd.f32 %v90, %v95
    %99 = vst.msk [vmem:[#allocation7] sm:$0xff] %vm51, %v97
    %100 = vst.msk [vmem:[#allocation7 + $0x8] sm:$0xff] %vm51, %v98
    // Predicated region
    $region26: #{tpu_custom_call.1} parent=1 // pred_check
      _
    $region27: #{tpu_custom_call.1} parent=1 // pred_check_branch
      %102 = sbr.rel (0) target = $region29
    $region28: #{tpu_custom_call.1} parent=1 // pred_region
      %s104 = ssub.s32 256, 256
      %105 = vsyncadd [#allocation4], %s104
      %s106 = sshll.u32 [#allocation7], 4
      %s107 = int_to_ptr.vmem [resolvable:$true] %s106
      %112 = dma.vmem_to_hbm [thread:$0]  %s107, 256, %s4, [#allocation4], 128, 128, 8
    $region29: #{tpu_custom_call.1} parent=1 // pred_fallthru
      _
    // Predicated region
    $region30: #{tpu_custom_call.1} parent=1 // pred_check
      _
    $region31: #{tpu_custom_call.1} parent=1 // pred_check_branch
      %114 = sbr.rel (0) target = $region33
    $region32: #{tpu_custom_call.1} parent=1 // pred_region
      %115 = dma.done [#allocation4], 256
    $region33: #{tpu_custom_call.1} parent=1 // pred_fallthru
      _
    %116 = vsyncpa [#allocation3], 1
    %117 = vsyncpa [#allocation6], 1
    %118 = vsyncpa [#allocation4], 1

</llo_original>
